<compile_context>
chip_gen: v5e
topology: v5e:2x2
jax: 0.10.0
libtpu: 0.0.40
codegen_flags: <defaults>
</compile_context>

<pallas_src>
import functools
import math

import jax
import jax.numpy as jnp
from jax.experimental import pallas as pl
from jax.experimental.pallas import tpu as pltpu


# ----------------------------------------------------------------------------
# Pallas kernel
# ----------------------------------------------------------------------------
def _fpe_kernel(x_ref, expand_ref, o_ref, *, precision):
    # x_ref      : (tm, D+1)   row tile of inputs with a trailing ones column
    # expand_ref : (D+1, tn)   one-hot expansion pre-scaled by 2*pi*freq; the
    #                          last row holds pi/2 on cos lanes (0 on sin lanes)
    # o_ref      : (tm, tn)    output tile
    x = x_ref[...].astype(jnp.float32)
    phase = jnp.dot(
        x,
        expand_ref[...],
        precision=precision,
        preferred_element_type=jnp.float32,
    )
    # Exactly one transcendental per output lane (cos = sin(phase + pi/2),
    # offset already inside `phase`).  Store narrows to o_ref.dtype only.
    o_ref[...] = jnp.sin(phase).astype(o_ref.dtype)


# ----------------------------------------------------------------------------
# Parameter construction (matches the PyTorch __init__)
# ----------------------------------------------------------------------------
def make_freq(input_dim, nb_per_input, min_freq=None, max_freq=None):
    if min_freq is None:
        min_freq = [0.01] * input_dim
    if max_freq is None:
        max_freq = [1.0] * input_dim
    assert len(min_freq) == input_dim and len(max_freq) == input_dim
    rows = [
        jnp.exp(jnp.linspace(math.log(a), math.log(b), nb_per_input))
        for a, b in zip(min_freq, max_freq)
    ]
    return jnp.stack(rows, axis=0).astype(jnp.float32)  # (D, F)


# ----------------------------------------------------------------------------
# Generation-aware tile selection
# ----------------------------------------------------------------------------
def _pick_tiles(n_rows, d_aug, d_out, out_itemsize, in_itemsize):
    try:
        vmem_cap = pltpu.get_tpu_info().vmem_capacity_bytes
    except Exception:
        vmem_cap = 64 << 20  # assume the smallest (v7x per-TC) when unknown
    small_vmem = vmem_cap <= (64 << 20)
    vmem_budget = (14 << 20) if small_vmem else (24 << 20)
    vmem_limit = (36 << 20) if small_vmem else (64 << 20)

    # Lane tile: full extent when small (single masked-store block, no pad or
    # post-kernel slice); otherwise 1024-lane (multiple of 128) slices so the
    # f32 phase intermediate and expand slice stay bounded for large F.
    tn = d_out if d_out <= 1024 else 1024

    # Footprint per step: double-buffered x + out tiles, double-buffered
    # expand slice, plus ~one f32 phase intermediate tile.
    fixed = 2 * d_aug * tn * 4
    per_row = 2 * d_aug * in_itemsize + 2 * tn * out_itemsize + tn * 4
    tm = max(8, min(512, (vmem_budget - fixed) // max(per_row, 1)))
    tm = max(8, (tm // 8) * 8)

    # Keep >= ~8 row-grid steps when there is enough work so both v7x
    # TensorCores get >= 4 pipelined steps each; tiny inputs get one block.
    target_steps = 8
    if n_rows >= target_steps * 8:
        tm = min(tm, max(8, ((pl.cdiv(n_rows, target_steps) + 7) // 8) * 8))
    else:
        tm = min(tm, ((max(n_rows, 1) + 7) // 8) * 8)
    return tm, tn, vmem_limit


# ----------------------------------------------------------------------------
# Wrapper
# ----------------------------------------------------------------------------
def fixed_position_embedding(x, freq, *, tm=None, out_dtype=None):
    """x: (..., D); freq: (D, F).  Returns (..., 2*D*F).

    out_dtype defaults to x.dtype.  For f32 inputs, pass out_dtype=jnp.bfloat16
    if the consumer accepts it -- halves the dominant HBM writeback (phase math
    stays f32 regardless).
    """
    D, F = freq.shape
    assert x.shape[-1] == D
    Dout = 2 * D * F
    if out_dtype is None:
        out_dtype = x.dtype if jnp.issubdtype(x.dtype, jnp.floating) else jnp.float32

    batch_shape = x.shape[:-1]
    N = int(math.prod(batch_shape)) if batch_shape else 1
    xf = x.reshape(N, D)  # keep input dtype; kernel widens in vregs
    # Fold the pi/2 cos-offset into the matmul: ones column on x, offset row
    # on the expansion table.
    x_aug = jnp.concatenate([xf, jnp.ones((N, 1), xf.dtype)], axis=-1)  # (N, D+1)

    # --- Constant tables (host-side, f32) -----------------------------------
    # expand[d, d*2F + 2f + s] = 2*pi*freq[d, f];  expand[D, 2k+1] = pi/2
    freq_flat = jnp.repeat(freq.astype(jnp.float32), 2, axis=1).reshape(1, Dout)
    expand_feat = (
        jnp.repeat(jnp.eye(D, dtype=jnp.float32), 2 * F, axis=1)
        * (2.0 * math.pi)
        * freq_flat
    )  # (D, Dout)
    offset_row = jnp.tile(
        jnp.array([0.0, math.pi / 2.0], dtype=jnp.float32), D * F
    ).reshape(1, Dout)  # (1, Dout)
    expand = jnp.concatenate([expand_feat, offset_row], axis=0)  # (D+1, Dout)

    out_itemsize = jnp.dtype(out_dtype).itemsize
    in_itemsize = jnp.dtype(x_aug.dtype).itemsize
    tm_auto, tn, vmem_limit = _pick_tiles(N, D + 1, Dout, out_itemsize, in_itemsize)
    tm = tm_auto if tm is None else max(8, (int(tm) // 8) * 8)

    grid = (pl.cdiv(N, tm), pl.cdiv(Dout, tn))  # masked boundary blocks, no pad

    # Contraction has <= 2 nonzero terms per column: HIGH is effectively exact
    # and halves MXU passes once the contraction dim grows (matters on v5e).
    precision = (
        jax.lax.Precision.HIGHEST if (D + 1) <= 64 else jax.lax.Precision.HIGH
    )

    cost = pl.CostEstimate(
        flops=2 * N * (D + 1) * Dout,
        transcendentals=N * Dout,  # one sin per output lane
        bytes_accessed=(
            N * (D + 1) * in_itemsize + (D + 1) * Dout * 4 + N * Dout * out_itemsize
        ),
    )

    out = pl.pallas_call(
        functools.partial(_fpe_kernel, precision=precision),
        out_shape=jax.ShapeDtypeStruct((N, Dout), out_dtype),
        grid_spec=pltpu.PrefetchScalarGridSpec(
            num_scalar_prefetch=0,
            grid=grid,
            in_specs=[
                pl.BlockSpec((tm, D + 1), lambda i, j: (i, 0)),
                pl.BlockSpec((D + 1, tn), lambda i, j: (0, j)),
            ],
            out_specs=pl.BlockSpec((tm, tn), lambda i, j: (i, j)),
        ),
        compiler_params=pltpu.CompilerParams(
            dimension_semantics=("parallel", "parallel"),
            vmem_limit_bytes=vmem_limit,
        ),
        cost_estimate=cost,
    )(x_aug, expand)

    return out.reshape(*batch_shape, Dout)


# ----------------------------------------------------------------------------
# Pure-JAX reference (mirrors the PyTorch forward)
# ----------------------------------------------------------------------------
def _reference(x, freq):
    p = 2.0 * math.pi * x[..., :, None].astype(jnp.float32) * freq  # (..., D, F)
    s = jnp.stack((jnp.sin(p), jnp.cos(p)), axis=-1)                # (..., D, F, 2)
    return s.reshape(*x.shape[:-1], -1)


if __name__ == "__main__":
    input_dim, nb_per_input = 4, 8       # D, F -> output_dim = 2*4*8 = 64
    batch, seq = 2, 8

    key = jax.random.PRNGKey(0)
    x = jax.random.normal(key, (batch, seq, input_dim), dtype=jnp.float32)
    freq = make_freq(input_dim, nb_per_input)

    # f32 path (matches the PyTorch module semantics).
    out = jax.block_until_ready(fixed_position_embedding(x, freq))
    ref = _reference(x, freq)
    assert out.shape == (batch, seq, 2 * input_dim * nb_per_input)
    assert out.dtype == jnp.float32
    assert jnp.allclose(out, ref, atol=1e-5, rtol=1e-5), "f32 mismatch vs reference"

    # Ragged row count (N = 15, tm = 8): exercises the masked boundary block —
    # no row pad and no post-kernel slice on either axis.
    x2 = jax.random.normal(jax.random.PRNGKey(1), (5, 3, input_dim), jnp.float32)
    out2 = jax.block_until_ready(fixed_position_embedding(x2, freq, tm=8))
    assert jnp.allclose(out2, _reference(x2, freq), atol=1e-5, rtol=1e-5), (
        "ragged mismatch vs reference"
    )

    # bf16 input -> bf16 output (halves the dominant HBM writeback).
    x_bf = x.astype(jnp.bfloat16)
    out_bf = jax.block_until_ready(fixed_position_embedding(x_bf, freq))
    assert out_bf.dtype == jnp.bfloat16
    ref_bf = _reference(x_bf.astype(jnp.float32), freq)
    assert jnp.allclose(out_bf.astype(jnp.float32), ref_bf, atol=2e-2), (
        "bf16 mismatch vs reference"
    )

    print("KERNEL_OK")
</pallas_src>

<mosaic_0001>
module attributes {stable_mosaic.version = 11 : i64} {
  func.func @_fpe_kernel(%arg0: i32, %arg1: i32, %arg2: memref<16x5xf32, #tpu.memory_space<vmem>>, %arg3: memref<5x64xf32, #tpu.memory_space<vmem>>, %arg4: memref<16x64xf32, #tpu.memory_space<vmem>>) attributes {dimension_semantics = [#tpu.dimension_semantics<parallel>, #tpu.dimension_semantics<parallel>], iteration_bounds = array<i64: 1, 1>, scalar_prefetch = 0 : i64, scratch_operands = 0 : i64, tpu.core_type = #tpu.core_type<tc>, window_params = [{transform_indices = @transform_0, window_bounds = array<i64: 16, 5>}, {transform_indices = @transform_1, window_bounds = array<i64: 5, 64>}, {transform_indices = @transform_2, window_bounds = array<i64: 16, 64>}]} {
    %c0 = arith.constant 0 : index
    %c0_0 = arith.constant 0 : index
    %0 = vector.load %arg2[%c0, %c0_0] : memref<16x5xf32, #tpu.memory_space<vmem>>, vector<16x5xf32>
    %c0_1 = arith.constant 0 : index
    %c0_2 = arith.constant 0 : index
    %1 = vector.load %arg3[%c0_1, %c0_2] : memref<5x64xf32, #tpu.memory_space<vmem>>, vector<5x64xf32>
    %cst = arith.constant dense<0.000000e+00> : vector<16x64xf32>
    %2 = tpu.matmul %0, %1, %cst {dimension_numbers = #tpu.dot_dimension_numbers<[1], [0], [0], [1], [0, 0, 1, 1], [], []>, precision = #tpu.contract_precision<fp32>} : vector<16x5xf32>, vector<5x64xf32>, vector<16x64xf32> -> vector<16x64xf32>
    %3 = math.sin %2 : vector<16x64xf32>
    %c0_3 = arith.constant 0 : index
    %c0_4 = arith.constant 0 : index
    %4 = vector.load %arg4[%c0_3, %c0_4] : memref<16x64xf32, #tpu.memory_space<vmem>>, vector<16x64xf32>
    tpu.vector_store %arg4[%c0_3, %c0_4], %3 {strides = array<i32>} : memref<16x64xf32, #tpu.memory_space<vmem>>, vector<16x64xf32>,
    return
  }
  func.func @transform_0(%arg0: i32, %arg1: i32) -> (i32, i32) {
    %c0_i32 = arith.constant 0 : i32
    %c0_i32_0 = arith.constant 0 : i32
    return %arg0, %c0_i32 : i32, i32
  }
  func.func @transform_1(%arg0: i32, %arg1: i32) -> (i32, i32) {
    %c0_i32 = arith.constant 0 : i32
    %c0_i32_0 = arith.constant 0 : i32
    return %c0_i32, %arg1 : i32, i32
  }
  func.func @transform_2(%arg0: i32, %arg1: i32) -> (i32, i32) {
    %c0_i32 = arith.constant 0 : i32
    return %arg0, %arg1 : i32, i32
  }
}

</mosaic_0001>

<llo_original>
// kernel: tpu_custom_call.1
$region0: #{tpu_custom_call.1}
  #allocation0 [shape = 'u32[]', space=smem, size = 0x4, offset = 0x4, fixed_abs, tag = 'smem constant byte address 0x4 - core index']
  #allocation1 [shape = 'u32[72,128]{1,0:T(1,128)}', space=vmem, size = 0x9000, scoped, tag = 'internal scratch']
  %s0 = inlined_call_operand.vmem [shape: f32[16,5], index: 0, kind: input, shape index: {}]
  %s1 = inlined_call_operand.vmem [shape: f32[5,64], index: 1, kind: input, shape index: {}]
  %s2 = inlined_call_operand.hbm [shape: f32[16,64], index: 2, kind: output, shape index: {}]
  %s3 = sld [smem:[#allocation0]]
  $region18: #{tpu_custom_call.1} parent=0
    _
  %s5 = ssub.s32 1, %s3
  %s6 = scalar_select 0, %s5, %s3
  $region1: #{tpu_custom_call.1} parent=0
    #allocation2 [shape = 'u8[8192]{0}', space=vmem, size = 0x2000, scoped, tag = 'output window, operand 0, single buffered']
    #allocation3 [shape = 's32[1]{0}', space=sflag, size = 0x4, scoped, tag = 'scoped memory for tpu_custom_call.1']
    %7 = vsyncpa [#allocation3], 0
    // Predicated region
    $region2: #{tpu_custom_call.1} parent=1 // pred_check
      _
    $region3: #{tpu_custom_call.1} parent=1 // pred_check_branch
      %9 = sbr.rel (0) target = $region5
    $region4: #{tpu_custom_call.1} parent=1 // pred_region
      _
    $region5: #{tpu_custom_call.1} parent=1 // pred_fallthru
      _
    // Predicated region
    $region6: #{tpu_custom_call.1} parent=1 // pred_check
      _
    $region7: #{tpu_custom_call.1} parent=1 // pred_check_branch
      %11 = sbr.rel (0) target = $region9
    $region8: #{tpu_custom_call.1} parent=1 // pred_region
      _
    $region9: #{tpu_custom_call.1} parent=1 // pred_fallthru
      _
    %v12 = vld [vmem:[%s0] sm:$0xff]
    %v13 = vld [vmem:[%s0 + $0x8] sm:$0xff]
    %v14 = vld [vmem:[%s1] sm:$0x1f]
    %vm15 = vcmask 39936
    %v17 = vsel %vm15, %v12, 0
    %v20 = vsel %vm15, %v13, 0
    %vm22 = vcmask 1044480
    %v24 = vsel %vm22, %v14, 0
    %26 = vmatpush.msra.mxu0 0.0
    %27 = vmatpush.msra.mxu0 0.0
    %28 = vmatpush.msra.mxu0 0.0
    %29 = vmatpush.msra.mxu0 0.0
    %30 = vmatpush.msra.mxu0 0.0
    %31 = vmatpush.msra.mxu0 0.0
    %32 = vmatpush.msra.mxu0 0.0
    %33 = vmatpush.msra.mxu0 0.0
    %34 = vmatpush.msra.mxu0 0.0
    %35 = vmatpush.msra.mxu0 0.0
    %36 = vmatpush.msra.mxu0 0.0
    %37 = vmatpush.msra.mxu0 0.0
    %38 = vmatpush.msra.mxu0 0.0
    %39 = vmatpush.msra.mxu0 0.0
    %40 = vmatpush.msra.mxu0 0.0
    %v41 = vand.u32 %v24, 4294901760
    %42 = vmatpush.msra.mxu0 %v41
    %v43 = vand.u32 %v17, 4294901760
    %v44 = vsub.f32 %v17, %v43
    %v45 = vand.u32 %v44, 4294901760
    %v46 = vsub.f32 %v44, %v45
    %v47 = vand.u32 %v46, 4294901760
    %48 = vmatmul.f32.gmra.mxu0 %v47
    %v49 = vpop.f32.mrf.mxu0
    %v50 = vadd.f32 0.0, %v49
    %v51 = vand.u32 %v20, 4294901760
    %v52 = vsub.f32 %v20, %v51
    %v53 = vand.u32 %v52, 4294901760
    %v54 = vsub.f32 %v52, %v53
    %v55 = vand.u32 %v54, 4294901760
    %56 = vmatmul.f32.gmra.mxu0 %v55
    %v57 = vpop.f32.mrf.mxu0
    %v58 = vadd.f32 0.0, %v57
    %59 = vdwg.mxu0
    %60 = vmatpush.msra.mxu0 0.0
    %61 = vmatpush.msra.mxu0 0.0
    %62 = vmatpush.msra.mxu0 0.0
    %63 = vmatpush.msra.mxu0 0.0
    %64 = vmatpush.msra.mxu0 0.0
    %65 = vmatpush.msra.mxu0 0.0
    %66 = vmatpush.msra.mxu0 0.0
    %67 = vmatpush.msra.mxu0 0.0
    %68 = vmatpush.msra.mxu0 0.0
    %69 = vmatpush.msra.mxu0 0.0
    %70 = vmatpush.msra.mxu0 0.0
    %71 = vmatpush.msra.mxu0 0.0
    %72 = vmatpush.msra.mxu0 0.0
    %73 = vmatpush.msra.mxu0 0.0
    %74 = vmatpush.msra.mxu0 0.0
    %v75 = vand.u32 %v24, 4294901760
    %v76 = vsub.f32 %v24, %v75
    %v77 = vand.u32 %v76, 4294901760
    %v78 = vsub.f32 %v76, %v77
    %v79 = vand.u32 %v78, 4294901760
    %80 = vmatpush.msra.mxu0 %v79
    %v81 = vand.u32 %v17, 4294901760
    %82 = vmatmul.f32.gmra.mxu0 %v81
    %v83 = vpop.f32.mrf.mxu0
    %v84 = vadd.f32 %v50, %v83
    %v85 = vand.u32 %v20, 4294901760
    %86 = vmatmul.f32.gmra.mxu0 %v85
    %v87 = vpop.f32.mrf.mxu0
    %v88 = vadd.f32 %v58, %v87
    %89 = vdwg.mxu0
    %90 = vmatpush.msra.mxu0 0.0
    %91 = vmatpush.msra.mxu0 0.0
    %92 = vmatpush.msra.mxu0 0.0
    %93 = vmatpush.msra.mxu0 0.0
    %94 = vmatpush.msra.mxu0 0.0
    %95 = vmatpush.msra.mxu0 0.0
    %96 = vmatpush.msra.mxu0 0.0
    %97 = vmatpush.msra.mxu0 0.0
    %98 = vmatpush.msra.mxu0 0.0
    %99 = vmatpush.msra.mxu0 0.0
    %100 = vmatpush.msra.mxu0 0.0
    %101 = vmatpush.msra.mxu0 0.0
    %102 = vmatpush.msra.mxu0 0.0
    %103 = vmatpush.msra.mxu0 0.0
    %104 = vmatpush.msra.mxu0 0.0
    %v105 = vand.u32 %v24, 4294901760
    %v106 = vsub.f32 %v24, %v105
    %107 = vmatpush.msra.mxu0 %v106
    %v108 = vand.u32 %v17, 4294901760
    %v109 = vsub.f32 %v17, %v108
    %110 = vmatmul.f32.gmra.mxu0 %v109
    %v111 = vpop.f32.mrf.mxu0
    %v112 = vadd.f32 %v84, %v111
    %v113 = vand.u32 %v20, 4294901760
    %v114 = vsub.f32 %v20, %v113
    %115 = vmatmul.f32.gmra.mxu0 %v114
    %v116 = vpop.f32.mrf.mxu0
    %v117 = vadd.f32 %v88, %v116
    %118 = vdwg.mxu0
    %119 = vmatpush.msra.mxu0 0.0
    %120 = vmatpush.msra.mxu0 0.0
    %121 = vmatpush.msra.mxu0 0.0
    %122 = vmatpush.msra.mxu0 0.0
    %123 = vmatpush.msra.mxu0 0.0
    %124 = vmatpush.msra.mxu0 0.0
    %125 = vmatpush.msra.mxu0 0.0
    %126 = vmatpush.msra.mxu0 0.0
    %127 = vmatpush.msra.mxu0 0.0
    %128 = vmatpush.msra.mxu0 0.0
    %129 = vmatpush.msra.mxu0 0.0
    %130 = vmatpush.msra.mxu0 0.0
    %131 = vmatpush.msra.mxu0 0.0
    %132 = vmatpush.msra.mxu0 0.0
    %133 = vmatpush.msra.mxu0 0.0
    %v134 = vand.u32 %v24, 4294901760
    %135 = vmatpush.msra.mxu0 %v134
    %v136 = vand.u32 %v17, 4294901760
    %v137 = vsub.f32 %v17, %v136
    %v138 = vand.u32 %v137, 4294901760
    %139 = vmatmul.f32.gmra.mxu0 %v138
    %v140 = vpop.f32.mrf.mxu0
    %v141 = vadd.f32 %v112, %v140
    %v142 = vand.u32 %v20, 4294901760
    %v143 = vsub.f32 %v20, %v142
    %v144 = vand.u32 %v143, 4294901760
    %145 = vmatmul.f32.gmra.mxu0 %v144
    %v146 = vpop.f32.mrf.mxu0
    %v147 = vadd.f32 %v117, %v146
    %148 = vdwg.mxu0
    %149 = vmatpush.msra.mxu0 0.0
    %150 = vmatpush.msra.mxu0 0.0
    %151 = vmatpush.msra.mxu0 0.0
    %152 = vmatpush.msra.mxu0 0.0
    %153 = vmatpush.msra.mxu0 0.0
    %154 = vmatpush.msra.mxu0 0.0
    %155 = vmatpush.msra.mxu0 0.0
    %156 = vmatpush.msra.mxu0 0.0
    %157 = vmatpush.msra.mxu0 0.0
    %158 = vmatpush.msra.mxu0 0.0
    %159 = vmatpush.msra.mxu0 0.0
    %160 = vmatpush.msra.mxu0 0.0
    %161 = vmatpush.msra.mxu0 0.0
    %162 = vmatpush.msra.mxu0 0.0
    %163 = vmatpush.msra.mxu0 0.0
    %v164 = vand.u32 %v24, 4294901760
    %v165 = vsub.f32 %v24, %v164
    %v166 = vand.u32 %v165, 4294901760
    %167 = vmatpush.msra.mxu0 %v166
    %v168 = vand.u32 %v17, 4294901760
    %169 = vmatmul.f32.gmra.mxu0 %v168
    %v170 = vpop.f32.mrf.mxu0
    %v171 = vadd.f32 %v141, %v170
    %v172 = vand.u32 %v20, 4294901760
    %173 = vmatmul.f32.gmra.mxu0 %v172
    %v174 = vpop.f32.mrf.mxu0
    %v175 = vadd.f32 %v147, %v174
    %176 = vdwg.mxu0
    %177 = vmatpush.msra.mxu0 0.0
    %178 = vmatpush.msra.mxu0 0.0
    %179 = vmatpush.msra.mxu0 0.0
    %180 = vmatpush.msra.mxu0 0.0
    %181 = vmatpush.msra.mxu0 0.0
    %182 = vmatpush.msra.mxu0 0.0
    %183 = vmatpush.msra.mxu0 0.0
    %184 = vmatpush.msra.mxu0 0.0
    %185 = vmatpush.msra.mxu0 0.0
    %186 = vmatpush.msra.mxu0 0.0
    %187 = vmatpush.msra.mxu0 0.0
    %188 = vmatpush.msra.mxu0 0.0
    %189 = vmatpush.msra.mxu0 0.0
    %190 = vmatpush.msra.mxu0 0.0
    %191 = vmatpush.msra.mxu0 0.0
    %v192 = vand.u32 %v24, 4294901760
    %193 = vmatpush.msra.mxu0 %v192
    %v194 = vand.u32 %v17, 4294901760
    %195 = vmatmul.f32.gmra.mxu0 %v194
    %v196 = vpop.f32.mrf.mxu0
    %v197 = vadd.f32 %v171, %v196
    %v198 = vand.u32 %v20, 4294901760
    %199 = vmatmul.f32.gmra.mxu0 %v198
    %v200 = vpop.f32.mrf.mxu0
    %v201 = vadd.f32 %v175, %v200
    %202 = vdwg.mxu0
    %v203 = vand.u32 2147483647, %v197
    %vm204 = vcmp.le.f32.partialorder %v203, 0.7853982
    %vm205 = vcmp.lt.s32.totalorder %v197, 0
    %v206 = vand.u32 %v197, 2139095040
    %v207 = vshrl.u32 %v206, 23
    %v208 = vsub.s32 %v207, 127
    %v209 = vand.u32 2147483647, %v197
    %v210 = vand.u32 %v209, 8388607
    %v211 = vor.u32 %v210, 8388608
    %v212 = vsub.s32 0, %v211
    %v213 = vadd.s32 %v208, 1
    %vm214 = vcmp.gt.s32.totalorder %v213, 0
    %v215 = vsel %vm214, %v213, 0
    %v216 = vshrl.u32 %v215, 5
    %v217 = vand.u32 %v215, 31
    %v218 = vsub.s32 32, %v217
    %v219 = vshrl.u32 683565275, %v218
    %v220 = vshll.u32 683565275, %v217
    %v221 = vshrl.u32 2475754826, %v218
    %v222 = vor.u32 %v220, %v221
    %v223 = vshll.u32 2475754826, %v217
    %v224 = vshrl.u32 2131351028, %v218
    %v225 = vor.u32 %v223, %v224
    %v226 = vshll.u32 2131351028, %v217
    %v227 = vshrl.u32 2102212464, %v218
    %v228 = vor.u32 %v226, %v227
    %v229 = vshll.u32 2102212464, %v217
    %v230 = vshrl.u32 920167782, %v218
    %v231 = vor.u32 %v229, %v230
    %v232 = vshll.u32 920167782, %v217
    %v233 = vshrl.u32 1326507024, %v218
    %v234 = vor.u32 %v232, %v233
    %vm235 = vcmp.lt.s32.totalorder %v216, 1
    %vm236 = vcmp.lt.s32.totalorder %v216, 2
    %vm237 = vcmp.lt.s32.totalorder %v216, 3
    %vm238 = vcmp.lt.s32.totalorder %v216, 4
    %v239 = vsel %vm235, %v219, %v222
    %v240 = vsel %vm238, %v228, 2102212464
    %v241 = vsel %vm237, %v225, %v240
    %v242 = vsel %vm236, %v239, %v241
    %v243 = vsel %vm235, %v222, %v225
    %v244 = vsel %vm238, %v231, 920167782
    %v245 = vsel %vm237, %v228, %v244
    %v246 = vsel %vm236, %v243, %v245
    %v247 = vsel %vm235, %v225, %v228
    %v248 = vsel %vm238, %v234, 1326507024
    %v249 = vsel %vm237, %v231, %v248
    %v250 = vsel %vm236, %v247, %v249
    %v251 = vshll.u32 %v211, 8
    %v252 = vand.u32 %v251, 65535
    %v253 = vshrl.u32 %v251, 16
    %v254 = vand.u32 %v250, 65535
    %v255 = vshrl.u32 %v250, 16
    %v256 = vmul.u32 %v252, %v254
    %v257 = vmul.u32 %v252, %v255
    %v258 = vmul.u32 %v253, %v254
    %v259 = vmul.u32 %v253, %v255
    %v260 = vshll.u32 %v257, 16
    %v261 = vshrl.u32 %v257, 16
    %v262 = vshll.u32 %v258, 16
    %v263 = vshrl.u32 %v258, 16
    %vm264 = vc.u32 %v256, %v260
    %v265 = vsel %vm264, 1, 0
    %v266 = vadd.s32 %v256, %v260
    %v267 = vadd.s32 %v259, %v265
    %vm268 = vc.u32 %v266, %v262
    %v269 = vsel %vm268, 1, 0
    %v270 = vadd.s32 %v266, %v262
    %v271 = vadd.s32 %v267, %v269
    %v272 = vadd.s32 %v271, %v261
    %v273 = vadd.s32 %v272, %v263
    %v274 = vand.u32 %v251, 65535
    %v275 = vshrl.u32 %v251, 16
    %v276 = vand.u32 %v246, 65535
    %v277 = vshrl.u32 %v246, 16
    %v278 = vmul.u32 %v274, %v276
    %v279 = vmul.u32 %v274, %v277
    %v280 = vmul.u32 %v275, %v276
    %v281 = vmul.u32 %v275, %v277
    %v282 = vshll.u32 %v279, 16
    %v283 = vshrl.u32 %v279, 16
    %v284 = vshll.u32 %v280, 16
    %v285 = vshrl.u32 %v280, 16
    %vm286 = vc.u32 %v278, %v282
    %v287 = vsel %vm286, 1, 0
    %v288 = vadd.s32 %v278, %v282
    %v289 = vadd.s32 %v281, %v287
    %vm290 = vc.u32 %v288, %v284
    %v291 = vsel %vm290, 1, 0
    %v292 = vadd.s32 %v288, %v284
    %v293 = vadd.s32 %v289, %v291
    %v294 = vadd.s32 %v293, %v283
    %v295 = vadd.s32 %v294, %v285
    %v296 = vmul.u32 %v251, %v242
    %v297 = vadd.s32 %v273, %v292
    %vm298 = vc.u32 %v273, %v292
    %v299 = vadd.s32 %v295, 1
    %v300 = vsel %vm298, %v299, %v295
    %v301 = vadd.s32 %v296, %v300
    %v302 = vadd.s32 %v301, 536870912
    %v303 = vshrl.u32 %v302, 30
    %v304 = vshll.u32 %v303, 30
    %v305 = vsub.s32 %v301, %v304
    %vm306 = vcmp.lt.s32.totalorder %v305, 0
    %v307 = vsub.s32 0, %v305
    %v308 = vsel %vm306, %v307, %v305
    %v309 = vclz %v308
    %v310 = vsub.s32 %v309, 2
    %vm311 = vcmp.gt.s32.totalorder 0, %v310
    %v312 = vsel %vm311, 0, %v310
    %v313 = vsub.s32 32, %v312
    %v314 = vshll.u32 %v305, %v312
    %v315 = vshrl.u32 %v297, %v313
    %v316 = vor.u32 %v314, %v315
    %v317 = vsub.s32 4294967266, %v312
    %v318 = vadd.s32 %v317, 127
    %v319 = vshll.u32 %v318, 23
    %v320 = vor.u32 4788187, %v319
    %v321 = vand.u32 2147483647, %v320
    %v323 = vcvt.s32.f32 %v316
    %v324 = vmul.f32 %v323, %v321
    %v325 = vxor.u32 %v324, 2147483648
    %v326 = vsel %vm205, %v325, %v324
    %v327 = vsub.s32 4, %v303
    %v328 = vsel %vm205, %v327, %v303
    %v329 = vsel %vm204, %v197, %v326
    %v330 = vsel %vm204, 0, %v328
    %v331 = vmul.f32 %v329, %v329
    %v332 = vmul.f32 %v331, -0.001358992
    %v333 = vadd.f32 %v332, 0.041655596
    %v334 = vmul.f32 %v331, %v333
    %v335 = vadd.f32 %v334, -0.4999988
    %v336 = vmul.f32 %v331, %v335
    %v337 = vadd.f32 1.0, %v336
    %v338 = vmul.f32 %v329, %v329
    %v339 = vmul.f32 %v338, -0.00019511016
    %v340 = vadd.f32 %v339, 0.008332121
    %v341 = vmul.f32 %v338, %v340
    %v342 = vadd.f32 %v341, -0.16666654
    %v343 = vmul.f32 %v338, %v342
    %v344 = vadd.f32 %v343, 1.0
    %v345 = vmul.f32 %v344, %v329
    %vm346 = vweird.f32 %v197
    %v347 = vadd.s32 %v330, 3
    %v348 = vand.u32 %v347, 3
    %vm349 = vcmp.lt.s32.totalorder %v348, 2
    %vm350 = vcmp.eq.s32.totalorder %v348, 0
    %v351 = vxor.u32 %v345, 2147483648
    %v352 = vsel %vm350, %v337, %v351
    %vm353 = vcmp.eq.s32.totalorder %v348, 2
    %v354 = vxor.u32 %v337, 2147483648
    %v355 = vsel %vm353, %v354, %v345
    %v356 = vsel %vm349, %v352, %v355
    %v357 = vsel %vm346, nan, %v356
    %v358 = vand.u32 2147483647, %v201
    %vm359 = vcmp.le.f32.partialorder %v358, 0.7853982
    %vm360 = vcmp.lt.s32.totalorder %v201, 0
    %v361 = vand.u32 %v201, 2139095040
    %v362 = vshrl.u32 %v361, 23
    %v363 = vsub.s32 %v362, 127
    %v364 = vand.u32 2147483647, %v201
    %v365 = vand.u32 %v364, 8388607
    %v366 = vor.u32 %v365, 8388608
    %v367 = vsub.s32 0, %v366
    %v368 = vadd.s32 %v363, 1
    %vm369 = vcmp.gt.s32.totalorder %v368, 0
    %v370 = vsel %vm369, %v368, 0
    %v371 = vshrl.u32 %v370, 5
    %v372 = vand.u32 %v370, 31
    %v373 = vsub.s32 32, %v372
    %v374 = vshrl.u32 683565275, %v373
    %v375 = vshll.u32 683565275, %v372
    %v376 = vshrl.u32 2475754826, %v373
    %v377 = vor.u32 %v375, %v376
    %v378 = vshll.u32 2475754826, %v372
    %v379 = vshrl.u32 2131351028, %v373
    %v380 = vor.u32 %v378, %v379
    %v381 = vshll.u32 2131351028, %v372
    %v382 = vshrl.u32 2102212464, %v373
    %v383 = vor.u32 %v381, %v382
    %v384 = vshll.u32 2102212464, %v372
    %v385 = vshrl.u32 920167782, %v373
    %v386 = vor.u32 %v384, %v385
    %v387 = vshll.u32 920167782, %v372
    %v388 = vshrl.u32 1326507024, %v373
    %v389 = vor.u32 %v387, %v388
    %vm390 = vcmp.lt.s32.totalorder %v371, 1
    %vm391 = vcmp.lt.s32.totalorder %v371, 2
    %vm392 = vcmp.lt.s32.totalorder %v371, 3
    %vm393 = vcmp.lt.s32.totalorder %v371, 4
    %v394 = vsel %vm390, %v374, %v377
    %v395 = vsel %vm393, %v383, 2102212464
    %v396 = vsel %vm392, %v380, %v395
    %v397 = vsel %vm391, %v394, %v396
    %v398 = vsel %vm390, %v377, %v380
    %v399 = vsel %vm393, %v386, 920167782
    %v400 = vsel %vm392, %v383, %v399
    %v401 = vsel %vm391, %v398, %v400
    %v402 = vsel %vm390, %v380, %v383
    %v403 = vsel %vm393, %v389, 1326507024
    %v404 = vsel %vm392, %v386, %v403
    %v405 = vsel %vm391, %v402, %v404
    %v406 = vshll.u32 %v366, 8
    %v407 = vand.u32 %v406, 65535
    %v408 = vshrl.u32 %v406, 16
    %v409 = vand.u32 %v405, 65535
    %v410 = vshrl.u32 %v405, 16
    %v411 = vmul.u32 %v407, %v409
    %v412 = vmul.u32 %v407, %v410
    %v413 = vmul.u32 %v408, %v409
    %v414 = vmul.u32 %v408, %v410
    %v415 = vshll.u32 %v412, 16
    %v416 = vshrl.u32 %v412, 16
    %v417 = vshll.u32 %v413, 16
    %v418 = vshrl.u32 %v413, 16
    %vm419 = vc.u32 %v411, %v415
    %v420 = vsel %vm419, 1, 0
    %v421 = vadd.s32 %v411, %v415
    %v422 = vadd.s32 %v414, %v420
    %vm423 = vc.u32 %v421, %v417
    %v424 = vsel %vm423, 1, 0
    %v425 = vadd.s32 %v421, %v417
    %v426 = vadd.s32 %v422, %v424
    %v427 = vadd.s32 %v426, %v416
    %v428 = vadd.s32 %v427, %v418
    %v429 = vand.u32 %v406, 65535
    %v430 = vshrl.u32 %v406, 16
    %v431 = vand.u32 %v401, 65535
    %v432 = vshrl.u32 %v401, 16
    %v433 = vmul.u32 %v429, %v431
    %v434 = vmul.u32 %v429, %v432
    %v435 = vmul.u32 %v430, %v431
    %v436 = vmul.u32 %v430, %v432
    %v437 = vshll.u32 %v434, 16
    %v438 = vshrl.u32 %v434, 16
    %v439 = vshll.u32 %v435, 16
    %v440 = vshrl.u32 %v435, 16
    %vm441 = vc.u32 %v433, %v437
    %v442 = vsel %vm441, 1, 0
    %v443 = vadd.s32 %v433, %v437
    %v444 = vadd.s32 %v436, %v442
    %vm445 = vc.u32 %v443, %v439
    %v446 = vsel %vm445, 1, 0
    %v447 = vadd.s32 %v443, %v439
    %v448 = vadd.s32 %v444, %v446
    %v449 = vadd.s32 %v448, %v438
    %v450 = vadd.s32 %v449, %v440
    %v451 = vmul.u32 %v406, %v397
    %v452 = vadd.s32 %v428, %v447
    %vm453 = vc.u32 %v428, %v447
    %v454 = vadd.s32 %v450, 1
    %v455 = vsel %vm453, %v454, %v450
    %v456 = vadd.s32 %v451, %v455
    %v457 = vadd.s32 %v456, 536870912
    %v458 = vshrl.u32 %v457, 30
    %v459 = vshll.u32 %v458, 30
    %v460 = vsub.s32 %v456, %v459
    %vm461 = vcmp.lt.s32.totalorder %v460, 0
    %v462 = vsub.s32 0, %v460
    %v463 = vsel %vm461, %v462, %v460
    %v464 = vclz %v463
    %v465 = vsub.s32 %v464, 2
    %vm466 = vcmp.gt.s32.totalorder 0, %v465
    %v467 = vsel %vm466, 0, %v465
    %v468 = vsub.s32 32, %v467
    %v469 = vshll.u32 %v460, %v467
    %v470 = vshrl.u32 %v452, %v468
    %v471 = vor.u32 %v469, %v470
    %v472 = vsub.s32 4294967266, %v467
    %v473 = vadd.s32 %v472, 127
    %v474 = vshll.u32 %v473, 23
    %v475 = vor.u32 4788187, %v474
    %v476 = vand.u32 2147483647, %v475
    %v478 = vcvt.s32.f32 %v471
    %v479 = vmul.f32 %v478, %v476
    %v480 = vxor.u32 %v479, 2147483648
    %v481 = vsel %vm360, %v480, %v479
    %v482 = vsub.s32 4, %v458
    %v483 = vsel %vm360, %v482, %v458
    %v484 = vsel %vm359, %v201, %v481
    %v485 = vsel %vm359, 0, %v483
    %v486 = vmul.f32 %v484, %v484
    %v487 = vmul.f32 %v486, -0.001358992
    %v488 = vadd.f32 %v487, 0.041655596
    %v489 = vmul.f32 %v486, %v488
    %v490 = vadd.f32 %v489, -0.4999988
    %v491 = vmul.f32 %v486, %v490
    %v492 = vadd.f32 1.0, %v491
    %v493 = vmul.f32 %v484, %v484
    %v494 = vmul.f32 %v493, -0.00019511016
    %v495 = vadd.f32 %v494, 0.008332121
    %v496 = vmul.f32 %v493, %v495
    %v497 = vadd.f32 %v496, -0.16666654
    %v498 = vmul.f32 %v493, %v497
    %v499 = vadd.f32 %v498, 1.0
    %v500 = vmul.f32 %v499, %v484
    %vm501 = vweird.f32 %v201
    %v502 = vadd.s32 %v485, 3
    %v503 = vand.u32 %v502, 3
    %vm504 = vcmp.lt.s32.totalorder %v503, 2
    %vm505 = vcmp.eq.s32.totalorder %v503, 0
    %v506 = vxor.u32 %v500, 2147483648
    %v507 = vsel %vm505, %v492, %v506
    %vm508 = vcmp.eq.s32.totalorder %v503, 2
    %v509 = vxor.u32 %v492, 2147483648
    %v510 = vsel %vm508, %v509, %v500
    %v511 = vsel %vm504, %v507, %v510
    %v512 = vsel %vm501, nan, %v511
    %vm513 = vcmask 523264
    %514 = vst.msk [vmem:[#allocation2] sm:$0xff] %vm513, %v357
    %515 = vst.msk [vmem:[#allocation2 + $0x8] sm:$0xff] %vm513, %v512
    // Predicated region
    $region10: #{tpu_custom_call.1} parent=1 // pred_check
      _
    $region11: #{tpu_custom_call.1} parent=1 // pred_check_branch
      %517 = sbr.rel (0) target = $region13
    $region12: #{tpu_custom_call.1} parent=1 // pred_region
      %519 = vsyncadd [#allocation3], 0
      %s520 = sshll.u32 [#allocation2], 4
      %s521 = int_to_ptr.vmem [resolvable:$true] %s520
      %s522 = sshll.u32 %s2, 4
      %s523 = int_to_ptr.hbm [resolvable:$true] %s522
      %528 = dma.vmem_to_hbm [thread:$0]  %s521, 256, %s523, [#allocation3], 128, 128, 8
    $region13: #{tpu_custom_call.1} parent=1 // pred_fallthru
      _
    // Predicated region
    $region14: #{tpu_custom_call.1} parent=1 // pred_check
      _
    $region15: #{tpu_custom_call.1} parent=1 // pred_check_branch
      %530 = sbr.rel (0) target = $region17
    $region16: #{tpu_custom_call.1} parent=1 // pred_region
      %532 = dma.done [#allocation3], 256
    $region17: #{tpu_custom_call.1} parent=1 // pred_fallthru
      _
    %533 = vsyncpa [#allocation3], 1

</llo_original>
